<compile_context>
chip_gen: v5e
topology: v5e:2x2
jax: 0.10.0
libtpu: 0.0.40
codegen_flags: <defaults>
</compile_context>

<pallas_src>
import math

import jax
import jax.numpy as jnp
from jax.experimental import pallas as pl
from jax.experimental.pallas import tpu as pltpu

H_LAYER = 1024
LANES = 128


def _head_fused_kernel(x_ref, wf_ref, bf_ref, o_ref):
    # One fused matmul + bias add.  The "+1" for the s-head is already folded
    # into bf, so this single expression reproduces all three heads.
    o_ref[...] = (
        jnp.dot(x_ref[...], wf_ref[...], preferred_element_type=jnp.float32)
        + bf_ref[...]
    )


def _round_up(x, m):
    return ((x + m - 1) // m) * m


def pack_head_params(params, output_dim_in, output_dim_out, tile_n=2048):
    """Packs (wW, wB, bW, bB, sW, sB) into one fused weight/bias pair.

    - Concatenates the three heads along the output-feature axis.
    - Folds the `1 +` of the s-head into its bias.
    - Zero-pads the column count to a lane-dense multiple of 128 (and, when the
      fused width exceeds `tile_n`, to a multiple of `tile_n` so it can be
      grid-tiled evenly).
    Do this once at parameter-setup time, not per forward call.
    """
    wW, wB, bW, bB, sW, sB = params
    n_w = output_dim_in * output_dim_out
    n_b = output_dim_out
    n_total = n_w + 2 * n_b

    n_pad = _round_up(n_total, LANES)
    if n_pad > tile_n:
        n_pad = _round_up(n_pad, tile_n)

    Wf = jnp.concatenate([wW, bW, sW], axis=1)
    Bf = jnp.concatenate([wB, bB, sB + 1.0], axis=1)   # fold "1 + s" into bias

    pad = n_pad - n_total
    if pad:
        Wf = jnp.pad(Wf, ((0, 0), (0, pad)))
        Bf = jnp.pad(Bf, ((0, 0), (0, pad)))
    return Wf, Bf


def head_forward(x, packed_params, output_dim_in, output_dim_out, tile_n=2048):
    """Runs the Head forward pass.  x: (B, 1024) float32."""
    Wf, Bf = packed_params
    B = x.shape[0]
    H, n_pad = Wf.shape
    n_w = output_dim_in * output_dim_out
    n_b = output_dim_out

    cost = pl.CostEstimate(
        flops=2 * B * H * n_pad,
        transcendentals=0,
        bytes_accessed=4 * (B * H + H * n_pad + n_pad + B * n_pad),
    )

    if n_pad <= tile_n:
        # Single-block path: no grid, no pipelining, operands resident in VMEM.
        y = pl.pallas_call(
            _head_fused_kernel,
            out_shape=jax.ShapeDtypeStruct((B, n_pad), jnp.float32),
            in_specs=[
                pl.BlockSpec(memory_space=pltpu.MemorySpace.VMEM),  # x
                pl.BlockSpec(memory_space=pltpu.MemorySpace.VMEM),  # fused W
                pl.BlockSpec(memory_space=pltpu.MemorySpace.VMEM),  # fused bias
            ],
            out_specs=pl.BlockSpec(memory_space=pltpu.MemorySpace.VMEM),
            cost_estimate=cost,
        )(x, Wf, Bf)
    else:
        # N-tiled path for large fused widths: split the output-feature axis
        # over a parallel grid axis (VMEM-fit on v5e/v7x, megacore on v7x).
        grid_n = n_pad // tile_n
        y = pl.pallas_call(
            _head_fused_kernel,
            out_shape=jax.ShapeDtypeStruct((B, n_pad), jnp.float32),
            grid=(grid_n,),
            in_specs=[
                pl.BlockSpec((B, H), lambda j: (0, 0)),        # x (reused)
                pl.BlockSpec((H, tile_n), lambda j: (0, j)),   # fused W tile
                pl.BlockSpec((1, tile_n), lambda j: (0, j)),   # fused bias tile
            ],
            out_specs=pl.BlockSpec((B, tile_n), lambda j: (0, j)),
            compiler_params=pltpu.CompilerParams(
                dimension_semantics=("parallel",)),
            cost_estimate=cost,
        )(x, Wf, Bf)

    # Glue slices/reshapes (match torch .view semantics, row-major).
    w = y[:, :n_w].reshape(-1, output_dim_out, output_dim_in)
    b = y[:, n_w:n_w + n_b].reshape(-1, output_dim_out, 1)
    s = y[:, n_w + n_b:n_w + 2 * n_b].reshape(-1, output_dim_out, 1)
    return w, b, s


def init_head_params(key, output_dim_in, output_dim_out):
    """Deterministic synthetic init mimicking torch defaults + init_layers().

    - W, s linears: weight/bias ~ U(-1/sqrt(H), 1/sqrt(H))  (torch default)
    - b linear: weight zeroed (per init_layers), bias ~ U(-1/sqrt(H), 1/sqrt(H))
    Weights are stored transposed as (H, out_features) for the kernel.
    """
    n_w = output_dim_in * output_dim_out
    n_b = output_dim_out
    bound = 1.0 / math.sqrt(H_LAYER)
    k = jax.random.split(key, 5)

    wW = jax.random.uniform(k[0], (H_LAYER, n_w), jnp.float32, -bound, bound)
    wB = jax.random.uniform(k[1], (1, n_w), jnp.float32, -bound, bound)

    bW = jnp.zeros((H_LAYER, n_b), jnp.float32)          # init_layers(): zeros_
    bB = jax.random.uniform(k[2], (1, n_b), jnp.float32, -bound, bound)

    sW = jax.random.uniform(k[3], (H_LAYER, n_b), jnp.float32, -bound, bound)
    sB = jax.random.uniform(k[4], (1, n_b), jnp.float32, -bound, bound)

    return (wW, wB, bW, bB, sW, sB)


if __name__ == "__main__":
    # Small shapes consistent with the module
    batch = 2
    output_dim_in = 16
    output_dim_out = 8

    key = jax.random.PRNGKey(0)
    k_x, k_p = jax.random.split(key)

    x = jax.random.normal(k_x, (batch, H_LAYER), jnp.float32)
    params = init_head_params(k_p, output_dim_in, output_dim_out)

    # Reference in plain JAX (unfused semantics of the torch module).
    wW, wB, bW, bB, sW, sB = params
    w_ref = (x @ wW + wB).reshape(-1, output_dim_out, output_dim_in)
    b_ref = (x @ bW + bB).reshape(-1, output_dim_out, 1)
    s_ref = (1.0 + (x @ sW + sB)).reshape(-1, output_dim_out, 1)

    # --- Single-block (no-grid) path -----------------------------------
    packed = pack_head_params(params, output_dim_in, output_dim_out)
    w, b, s = head_forward(x, packed, output_dim_in, output_dim_out)
    jax.block_until_ready((w, b, s))

    assert w.shape == (batch, output_dim_out, output_dim_in)
    assert b.shape == (batch, output_dim_out, 1)
    assert s.shape == (batch, output_dim_out, 1)
    assert jnp.allclose(w, w_ref, atol=1e-5)
    assert jnp.allclose(b, b_ref, atol=1e-5)
    assert jnp.allclose(s, s_ref, atol=1e-5)

    # --- N-tiled path (forced with a tiny tile to exercise the grid) ----
    packed_t = pack_head_params(params, output_dim_in, output_dim_out,
                                tile_n=128)
    w2, b2, s2 = head_forward(x, packed_t, output_dim_in, output_dim_out,
                              tile_n=128)
    jax.block_until_ready((w2, b2, s2))

    assert jnp.allclose(w2, w_ref, atol=1e-5)
    assert jnp.allclose(b2, b_ref, atol=1e-5)
    assert jnp.allclose(s2, s_ref, atol=1e-5)

    print("KERNEL_OK")
</pallas_src>

<mosaic_0001>
module attributes {stable_mosaic.version = 11 : i64} {
  func.func @_head_fused_kernel(%arg0: memref<2x1024xf32, #tpu.memory_space<vmem>>, %arg1: memref<1024x256xf32, #tpu.memory_space<vmem>>, %arg2: memref<1x256xf32, #tpu.memory_space<vmem>>, %arg3: memref<2x256xf32, #tpu.memory_space<vmem>>) attributes {dimension_semantics = [], scalar_prefetch = 0 : i64, scratch_operands = 0 : i64, tpu.core_type = #tpu.core_type<tc>} {
    %c0 = arith.constant 0 : index
    %c0_0 = arith.constant 0 : index
    %0 = vector.load %arg0[%c0, %c0_0] : memref<2x1024xf32, #tpu.memory_space<vmem>>, vector<2x1024xf32>
    %c0_1 = arith.constant 0 : index
    %c0_2 = arith.constant 0 : index
    %1 = vector.load %arg1[%c0_1, %c0_2] : memref<1024x256xf32, #tpu.memory_space<vmem>>, vector<1024x256xf32>
    %cst = arith.constant dense<0.000000e+00> : vector<2x256xf32>
    %2 = tpu.matmul %0, %1, %cst {dimension_numbers = #tpu.dot_dimension_numbers<[1], [0], [0], [1], [0, 0, 1, 1], [], []>} : vector<2x1024xf32>, vector<1024x256xf32>, vector<2x256xf32> -> vector<2x256xf32>
    %c0_3 = arith.constant 0 : index
    %c0_4 = arith.constant 0 : index
    %3 = vector.load %arg2[%c0_3, %c0_4] : memref<1x256xf32, #tpu.memory_space<vmem>>, vector<1x256xf32>
    %4 = vector.broadcast %3 : vector<1x256xf32> to vector<2x256xf32>
    %5 = arith.addf %2, %4 : vector<2x256xf32>
    %c0_5 = arith.constant 0 : index
    %c0_6 = arith.constant 0 : index
    %6 = vector.load %arg3[%c0_5, %c0_6] : memref<2x256xf32, #tpu.memory_space<vmem>>, vector<2x256xf32>
    tpu.vector_store %arg3[%c0_5, %c0_6], %5 {strides = array<i32>} : memref<2x256xf32, #tpu.memory_space<vmem>>, vector<2x256xf32>,
    return
  }
}

</mosaic_0001>

<llo_original>
// kernel: tpu_custom_call.1
$region0: #{tpu_custom_call.1}
  #allocation0 [shape = 'u32[]', space=smem, size = 0x4, offset = 0x4, fixed_abs, tag = 'smem constant byte address 0x4 - core index']
  #allocation1 [shape = 'u32[72,128]{1,0:T(1,128)}', space=vmem, size = 0x9000, scoped, tag = 'internal scratch']
  %s0 = inlined_call_operand.hbm [shape: f32[2,1024], index: 0, kind: input, shape index: {}]
  %s1 = inlined_call_operand.hbm [shape: f32[1024,256], index: 1, kind: input, shape index: {}]
  %s2 = inlined_call_operand.hbm [shape: f32[1,256], index: 2, kind: input, shape index: {}]
  %s3 = inlined_call_operand.hbm [shape: f32[2,256], index: 3, kind: output, shape index: {}]
  %s4 = sld [smem:[#allocation0]]
  $region34: #{tpu_custom_call.1} parent=0
    _
  %s6 = ssub.s32 1, %s4
  %s7 = scalar_select 0, %s6, %s4
  $region1: #{tpu_custom_call.1} parent=0
    #allocation2 [shape = 'u8[8192]{0}', space=vmem, size = 0x2000, scoped, tag = 'input window, operand 0, single buffered']
    #allocation3 [shape = 's32[1]{0}', space=sflag, size = 0x4, scoped, tag = 'scoped memory for tpu_custom_call.1']
    #allocation4 [shape = 's32[1]{0}', space=sflag, size = 0x4, scoped, tag = 'scoped memory for tpu_custom_call.1']
    #allocation5 [shape = 'u8[1048576]{0}', space=vmem, size = 0x100000, scoped, tag = 'input window, operand 1, single buffered']
    #allocation6 [shape = 's32[1]{0}', space=sflag, size = 0x4, scoped, tag = 'scoped memory for tpu_custom_call.1']
    #allocation7 [shape = 'u8[1024]{0}', space=vmem, size = 0x400, scoped, tag = 'input window, operand 2, single buffered']
    #allocation8 [shape = 'u8[2048]{0}', space=vmem, size = 0x800, scoped, tag = 'output window, operand 0, single buffered']
    %8 = vsyncpa [#allocation3], 0
    %9 = vsyncpa [#allocation6], 0
    %10 = vsyncpa [#allocation4], 0
    // Predicated region
    $region2: #{tpu_custom_call.1} parent=1 // pred_check
      _
    $region3: #{tpu_custom_call.1} parent=1 // pred_check_branch
      %12 = sbr.rel (0) target = $region5
    $region4: #{tpu_custom_call.1} parent=1 // pred_region
      %14 = vsyncadd [#allocation3], 0
      %s16 = sshll.u32 %s0, 4
      %s17 = int_to_ptr.hbm [resolvable:$true] %s16
      %s18 = sshll.u32 [#allocation2], 4
      %s19 = int_to_ptr.vmem [resolvable:$true] %s18
      %21 = dma.hbm_to_vmem [thread:$0]  %s17, 256, %s19, [#allocation3]
    $region5: #{tpu_custom_call.1} parent=1 // pred_fallthru
      _
    // Predicated region
    $region6: #{tpu_custom_call.1} parent=1 // pred_check
      _
    $region7: #{tpu_custom_call.1} parent=1 // pred_check_branch
      %23 = sbr.rel (0) target = $region9
    $region8: #{tpu_custom_call.1} parent=1 // pred_region
      %25 = vsyncadd [#allocation6], 0
      %s26 = sshll.u32 %s1, 4
      %s27 = int_to_ptr.hbm [resolvable:$true] %s26
      %s28 = sshll.u32 [#allocation5], 4
      %s29 = int_to_ptr.vmem [resolvable:$true] %s28
      %34 = dma.hbm_to_vmem [thread:$0]  %s27, 32768, %s29, [#allocation6], 256, 256, 16
    $region9: #{tpu_custom_call.1} parent=1 // pred_fallthru
      _
    // Predicated region
    $region10: #{tpu_custom_call.1} parent=1 // pred_check
      _
    $region11: #{tpu_custom_call.1} parent=1 // pred_check_branch
      %36 = sbr.rel (0) target = $region13
    $region12: #{tpu_custom_call.1} parent=1 // pred_region
      %38 = vsyncadd [#allocation6], 0
      %s40 = sshll.u32 %s2, 4
      %s41 = int_to_ptr.hbm [resolvable:$true] %s40
      %s42 = sshll.u32 [#allocation7], 4
      %s43 = int_to_ptr.vmem [resolvable:$true] %s42
      %45 = dma.hbm_to_vmem [thread:$0]  %s41, 32, %s43, [#allocation6]
    $region13: #{tpu_custom_call.1} parent=1 // pred_fallthru
      _
    // Predicated region
    $region14: #{tpu_custom_call.1} parent=1 // pred_check
      _
    $region15: #{tpu_custom_call.1} parent=1 // pred_check_branch
      %47 = sbr.rel (0) target = $region17
    $region16: #{tpu_custom_call.1} parent=1 // pred_region
      %49 = dma.done [#allocation3], 256
    $region17: #{tpu_custom_call.1} parent=1 // pred_fallthru
      _
    // Predicated region
    $region18: #{tpu_custom_call.1} parent=1 // pred_check
      _
    $region19: #{tpu_custom_call.1} parent=1 // pred_check_branch
      %51 = sbr.rel (0) target = $region21
    $region20: #{tpu_custom_call.1} parent=1 // pred_region
      %53 = dma.done [#allocation6], 32768
    $region21: #{tpu_custom_call.1} parent=1 // pred_fallthru
      _
    // Predicated region
    $region22: #{tpu_custom_call.1} parent=1 // pred_check
      _
    $region23: #{tpu_custom_call.1} parent=1 // pred_check_branch
      %55 = sbr.rel (0) target = $region25
    $region24: #{tpu_custom_call.1} parent=1 // pred_region
      %57 = dma.done [#allocation6], 32
    $region25: #{tpu_custom_call.1} parent=1 // pred_fallthru
      _
    %v58 = vld [vmem:[#allocation2] sm:$0xff]
    %v59 = vld [vmem:[#allocation2 + $0x8] sm:$0xff]
    %v60 = vld [vmem:[#allocation5] sm:$0xff]
    %v61 = vld [vmem:[#allocation5 + $0x8] sm:$0xff]
    %v62 = vld [vmem:[#allocation5 + $0x10] sm:$0xff]
    %v63 = vld [vmem:[#allocation5 + $0x18] sm:$0xff]
    %v64 = vld [vmem:[#allocation5 + $0x20] sm:$0xff]
    %v65 = vld [vmem:[#allocation5 + $0x28] sm:$0xff]
    %v66 = vld [vmem:[#allocation5 + $0x30] sm:$0xff]
    %v67 = vld [vmem:[#allocation5 + $0x38] sm:$0xff]
    %v68 = vld [vmem:[#allocation5 + $0x40] sm:$0xff]
    %v69 = vld [vmem:[#allocation5 + $0x48] sm:$0xff]
    %v70 = vld [vmem:[#allocation5 + $0x50] sm:$0xff]
    %v71 = vld [vmem:[#allocation5 + $0x58] sm:$0xff]
    %v72 = vld [vmem:[#allocation5 + $0x60] sm:$0xff]
    %v73 = vld [vmem:[#allocation5 + $0x68] sm:$0xff]
    %v74 = vld [vmem:[#allocation5 + $0x70] sm:$0xff]
    %v75 = vld [vmem:[#allocation5 + $0x78] sm:$0xff]
    %v76 = vld [vmem:[#allocation5 + $0x80] sm:$0xff]
    %v77 = vld [vmem:[#allocation5 + $0x88] sm:$0xff]
    %v78 = vld [vmem:[#allocation5 + $0x90] sm:$0xff]
    %v79 = vld [vmem:[#allocation5 + $0x98] sm:$0xff]
    %v80 = vld [vmem:[#allocation5 + $0xa0] sm:$0xff]
    %v81 = vld [vmem:[#allocation5 + $0xa8] sm:$0xff]
    %v82 = vld [vmem:[#allocation5 + $0xb0] sm:$0xff]
    %v83 = vld [vmem:[#allocation5 + $0xb8] sm:$0xff]
    %v84 = vld [vmem:[#allocation5 + $0xc0] sm:$0xff]
    %v85 = vld [vmem:[#allocation5 + $0xc8] sm:$0xff]
    %v86 = vld [vmem:[#allocation5 + $0xd0] sm:$0xff]
    %v87 = vld [vmem:[#allocation5 + $0xd8] sm:$0xff]
    %v88 = vld [vmem:[#allocation5 + $0xe0] sm:$0xff]
    %v89 = vld [vmem:[#allocation5 + $0xe8] sm:$0xff]
    %v90 = vld [vmem:[#allocation5 + $0xf0] sm:$0xff]
    %v91 = vld [vmem:[#allocation5 + $0xf8] sm:$0xff]
    %v92 = vld [vmem:[#allocation5 + $0x100] sm:$0xff]
    %v93 = vld [vmem:[#allocation5 + $0x108] sm:$0xff]
    %v94 = vld [vmem:[#allocation5 + $0x110] sm:$0xff]
    %v95 = vld [vmem:[#allocation5 + $0x118] sm:$0xff]
    %v96 = vld [vmem:[#allocation5 + $0x120] sm:$0xff]
    %v97 = vld [vmem:[#allocation5 + $0x128] sm:$0xff]
    %v98 = vld [vmem:[#allocation5 + $0x130] sm:$0xff]
    %v99 = vld [vmem:[#allocation5 + $0x138] sm:$0xff]
    %v100 = vld [vmem:[#allocation5 + $0x140] sm:$0xff]
    %v101 = vld [vmem:[#allocation5 + $0x148] sm:$0xff]
    %v102 = vld [vmem:[#allocation5 + $0x150] sm:$0xff]
    %v103 = vld [vmem:[#allocation5 + $0x158] sm:$0xff]
    %v104 = vld [vmem:[#allocation5 + $0x160] sm:$0xff]
    %v105 = vld [vmem:[#allocation5 + $0x168] sm:$0xff]
    %v106 = vld [vmem:[#allocation5 + $0x170] sm:$0xff]
    %v107 = vld [vmem:[#allocation5 + $0x178] sm:$0xff]
    %v108 = vld [vmem:[#allocation5 + $0x180] sm:$0xff]
    %v109 = vld [vmem:[#allocation5 + $0x188] sm:$0xff]
    %v110 = vld [vmem:[#allocation5 + $0x190] sm:$0xff]
    %v111 = vld [vmem:[#allocation5 + $0x198] sm:$0xff]
    %v112 = vld [vmem:[#allocation5 + $0x1a0] sm:$0xff]
    %v113 = vld [vmem:[#allocation5 + $0x1a8] sm:$0xff]
    %v114 = vld [vmem:[#allocation5 + $0x1b0] sm:$0xff]
    %v115 = vld [vmem:[#allocation5 + $0x1b8] sm:$0xff]
    %v116 = vld [vmem:[#allocation5 + $0x1c0] sm:$0xff]
    %v117 = vld [vmem:[#allocation5 + $0x1c8] sm:$0xff]
    %v118 = vld [vmem:[#allocation5 + $0x1d0] sm:$0xff]
    %v119 = vld [vmem:[#allocation5 + $0x1d8] sm:$0xff]
    %v120 = vld [vmem:[#allocation5 + $0x1e0] sm:$0xff]
    %v121 = vld [vmem:[#allocation5 + $0x1e8] sm:$0xff]
    %v122 = vld [vmem:[#allocation5 + $0x1f0] sm:$0xff]
    %v123 = vld [vmem:[#allocation5 + $0x1f8] sm:$0xff]
    %v124 = vld [vmem:[#allocation5 + $0x200] sm:$0xff]
    %v125 = vld [vmem:[#allocation5 + $0x208] sm:$0xff]
    %v126 = vld [vmem:[#allocation5 + $0x210] sm:$0xff]
    %v127 = vld [vmem:[#allocation5 + $0x218] sm:$0xff]
    %v128 = vld [vmem:[#allocation5 + $0x220] sm:$0xff]
    %v129 = vld [vmem:[#allocation5 + $0x228] sm:$0xff]
    %v130 = vld [vmem:[#allocation5 + $0x230] sm:$0xff]
    %v131 = vld [vmem:[#allocation5 + $0x238] sm:$0xff]
    %v132 = vld [vmem:[#allocation5 + $0x240] sm:$0xff]
    %v133 = vld [vmem:[#allocation5 + $0x248] sm:$0xff]
    %v134 = vld [vmem:[#allocation5 + $0x250] sm:$0xff]
    %v135 = vld [vmem:[#allocation5 + $0x258] sm:$0xff]
    %v136 = vld [vmem:[#allocation5 + $0x260] sm:$0xff]
    %v137 = vld [vmem:[#allocation5 + $0x268] sm:$0xff]
    %v138 = vld [vmem:[#allocation5 + $0x270] sm:$0xff]
    %v139 = vld [vmem:[#allocation5 + $0x278] sm:$0xff]
    %v140 = vld [vmem:[#allocation5 + $0x280] sm:$0xff]
    %v141 = vld [vmem:[#allocation5 + $0x288] sm:$0xff]
    %v142 = vld [vmem:[#allocation5 + $0x290] sm:$0xff]
    %v143 = vld [vmem:[#allocation5 + $0x298] sm:$0xff]
    %v144 = vld [vmem:[#allocation5 + $0x2a0] sm:$0xff]
    %v145 = vld [vmem:[#allocation5 + $0x2a8] sm:$0xff]
    %v146 = vld [vmem:[#allocation5 + $0x2b0] sm:$0xff]
    %v147 = vld [vmem:[#allocation5 + $0x2b8] sm:$0xff]
    %v148 = vld [vmem:[#allocation5 + $0x2c0] sm:$0xff]
    %v149 = vld [vmem:[#allocation5 + $0x2c8] sm:$0xff]
    %v150 = vld [vmem:[#allocation5 + $0x2d0] sm:$0xff]
    %v151 = vld [vmem:[#allocation5 + $0x2d8] sm:$0xff]
    %v152 = vld [vmem:[#allocation5 + $0x2e0] sm:$0xff]
    %v153 = vld [vmem:[#allocation5 + $0x2e8] sm:$0xff]
    %v154 = vld [vmem:[#allocation5 + $0x2f0] sm:$0xff]
    %v155 = vld [vmem:[#allocation5 + $0x2f8] sm:$0xff]
    %v156 = vld [vmem:[#allocation5 + $0x300] sm:$0xff]
    %v157 = vld [vmem:[#allocation5 + $0x308] sm:$0xff]
    %v158 = vld [vmem:[#allocation5 + $0x310] sm:$0xff]
    %v159 = vld [vmem:[#allocation5 + $0x318] sm:$0xff]
    %v160 = vld [vmem:[#allocation5 + $0x320] sm:$0xff]
    %v161 = vld [vmem:[#allocation5 + $0x328] sm:$0xff]
    %v162 = vld [vmem:[#allocation5 + $0x330] sm:$0xff]
    %v163 = vld [vmem:[#allocation5 + $0x338] sm:$0xff]
    %v164 = vld [vmem:[#allocation5 + $0x340] sm:$0xff]
    %v165 = vld [vmem:[#allocation5 + $0x348] sm:$0xff]
    %v166 = vld [vmem:[#allocation5 + $0x350] sm:$0xff]
    %v167 = vld [vmem:[#allocation5 + $0x358] sm:$0xff]
    %v168 = vld [vmem:[#allocation5 + $0x360] sm:$0xff]
    %v169 = vld [vmem:[#allocation5 + $0x368] sm:$0xff]
    %v170 = vld [vmem:[#allocation5 + $0x370] sm:$0xff]
    %v171 = vld [vmem:[#allocation5 + $0x378] sm:$0xff]
    %v172 = vld [vmem:[#allocation5 + $0x380] sm:$0xff]
    %v173 = vld [vmem:[#allocation5 + $0x388] sm:$0xff]
    %v174 = vld [vmem:[#allocation5 + $0x390] sm:$0xff]
    %v175 = vld [vmem:[#allocation5 + $0x398] sm:$0xff]
    %v176 = vld [vmem:[#allocation5 + $0x3a0] sm:$0xff]
    %v177 = vld [vmem:[#allocation5 + $0x3a8] sm:$0xff]
    %v178 = vld [vmem:[#allocation5 + $0x3b0] sm:$0xff]
    %v179 = vld [vmem:[#allocation5 + $0x3b8] sm:$0xff]
    %v180 = vld [vmem:[#allocation5 + $0x3c0] sm:$0xff]
    %v181 = vld [vmem:[#allocation5 + $0x3c8] sm:$0xff]
    %v182 = vld [vmem:[#allocation5 + $0x3d0] sm:$0xff]
    %v183 = vld [vmem:[#allocation5 + $0x3d8] sm:$0xff]
    %v184 = vld [vmem:[#allocation5 + $0x3e0] sm:$0xff]
    %v185 = vld [vmem:[#allocation5 + $0x3e8] sm:$0xff]
    %v186 = vld [vmem:[#allocation5 + $0x3f0] sm:$0xff]
    %v187 = vld [vmem:[#allocation5 + $0x3f8] sm:$0xff]
    %v188 = vld [vmem:[#allocation5 + $0x400] sm:$0xff]
    %v189 = vld [vmem:[#allocation5 + $0x408] sm:$0xff]
    %v190 = vld [vmem:[#allocation5 + $0x410] sm:$0xff]
    %v191 = vld [vmem:[#allocation5 + $0x418] sm:$0xff]
    %v192 = vld [vmem:[#allocation5 + $0x420] sm:$0xff]
    %v193 = vld [vmem:[#allocation5 + $0x428] sm:$0xff]
    %v194 = vld [vmem:[#allocation5 + $0x430] sm:$0xff]
    %v195 = vld [vmem:[#allocation5 + $0x438] sm:$0xff]
    %v196 = vld [vmem:[#allocation5 + $0x440] sm:$0xff]
    %v197 = vld [vmem:[#allocation5 + $0x448] sm:$0xff]
    %v198 = vld [vmem:[#allocation5 + $0x450] sm:$0xff]
    %v199 = vld [vmem:[#allocation5 + $0x458] sm:$0xff]
    %v200 = vld [vmem:[#allocation5 + $0x460] sm:$0xff]
    %v201 = vld [vmem:[#allocation5 + $0x468] sm:$0xff]
    %v202 = vld [vmem:[#allocation5 + $0x470] sm:$0xff]
    %v203 = vld [vmem:[#allocation5 + $0x478] sm:$0xff]
    %v204 = vld [vmem:[#allocation5 + $0x480] sm:$0xff]
    %v205 = vld [vmem:[#allocation5 + $0x488] sm:$0xff]
    %v206 = vld [vmem:[#allocation5 + $0x490] sm:$0xff]
    %v207 = vld [vmem:[#allocation5 + $0x498] sm:$0xff]
    %v208 = vld [vmem:[#allocation5 + $0x4a0] sm:$0xff]
    %v209 = vld [vmem:[#allocation5 + $0x4a8] sm:$0xff]
    %v210 = vld [vmem:[#allocation5 + $0x4b0] sm:$0xff]
    %v211 = vld [vmem:[#allocation5 + $0x4b8] sm:$0xff]
    %v212 = vld [vmem:[#allocation5 + $0x4c0] sm:$0xff]
    %v213 = vld [vmem:[#allocation5 + $0x4c8] sm:$0xff]
    %v214 = vld [vmem:[#allocation5 + $0x4d0] sm:$0xff]
    %v215 = vld [vmem:[#allocation5 + $0x4d8] sm:$0xff]
    %v216 = vld [vmem:[#allocation5 + $0x4e0] sm:$0xff]
    %v217 = vld [vmem:[#allocation5 + $0x4e8] sm:$0xff]
    %v218 = vld [vmem:[#allocation5 + $0x4f0] sm:$0xff]
    %v219 = vld [vmem:[#allocation5 + $0x4f8] sm:$0xff]
    %v220 = vld [vmem:[#allocation5 + $0x500] sm:$0xff]
    %v221 = vld [vmem:[#allocation5 + $0x508] sm:$0xff]
    %v222 = vld [vmem:[#allocation5 + $0x510] sm:$0xff]
    %v223 = vld [vmem:[#allocation5 + $0x518] sm:$0xff]
    %v224 = vld [vmem:[#allocation5 + $0x520] sm:$0xff]
    %v225 = vld [vmem:[#allocation5 + $0x528] sm:$0xff]
    %v226 = vld [vmem:[#allocation5 + $0x530] sm:$0xff]
    %v227 = vld [vmem:[#allocation5 + $0x538] sm:$0xff]
    %v228 = vld [vmem:[#allocation5 + $0x540] sm:$0xff]
    %v229 = vld [vmem:[#allocation5 + $0x548] sm:$0xff]
    %v230 = vld [vmem:[#allocation5 + $0x550] sm:$0xff]
    %v231 = vld [vmem:[#allocation5 + $0x558] sm:$0xff]
    %v232 = vld [vmem:[#allocation5 + $0x560] sm:$0xff]
    %v233 = vld [vmem:[#allocation5 + $0x568] sm:$0xff]
    %v234 = vld [vmem:[#allocation5 + $0x570] sm:$0xff]
    %v235 = vld [vmem:[#allocation5 + $0x578] sm:$0xff]
    %v236 = vld [vmem:[#allocation5 + $0x580] sm:$0xff]
    %v237 = vld [vmem:[#allocation5 + $0x588] sm:$0xff]
    %v238 = vld [vmem:[#allocation5 + $0x590] sm:$0xff]
    %v239 = vld [vmem:[#allocation5 + $0x598] sm:$0xff]
    %v240 = vld [vmem:[#allocation5 + $0x5a0] sm:$0xff]
    %v241 = vld [vmem:[#allocation5 + $0x5a8] sm:$0xff]
    %v242 = vld [vmem:[#allocation5 + $0x5b0] sm:$0xff]
    %v243 = vld [vmem:[#allocation5 + $0x5b8] sm:$0xff]
    %v244 = vld [vmem:[#allocation5 + $0x5c0] sm:$0xff]
    %v245 = vld [vmem:[#allocation5 + $0x5c8] sm:$0xff]
    %v246 = vld [vmem:[#allocation5 + $0x5d0] sm:$0xff]
    %v247 = vld [vmem:[#allocation5 + $0x5d8] sm:$0xff]
    %v248 = vld [vmem:[#allocation5 + $0x5e0] sm:$0xff]
    %v249 = vld [vmem:[#allocation5 + $0x5e8] sm:$0xff]
    %v250 = vld [vmem:[#allocation5 + $0x5f0] sm:$0xff]
    %v251 = vld [vmem:[#allocation5 + $0x5f8] sm:$0xff]
    %v252 = vld [vmem:[#allocation5 + $0x600] sm:$0xff]
    %v253 = vld [vmem:[#allocation5 + $0x608] sm:$0xff]
    %v254 = vld [vmem:[#allocation5 + $0x610] sm:$0xff]
    %v255 = vld [vmem:[#allocation5 + $0x618] sm:$0xff]
    %v256 = vld [vmem:[#allocation5 + $0x620] sm:$0xff]
    %v257 = vld [vmem:[#allocation5 + $0x628] sm:$0xff]
    %v258 = vld [vmem:[#allocation5 + $0x630] sm:$0xff]
    %v259 = vld [vmem:[#allocation5 + $0x638] sm:$0xff]
    %v260 = vld [vmem:[#allocation5 + $0x640] sm:$0xff]
    %v261 = vld [vmem:[#allocation5 + $0x648] sm:$0xff]
    %v262 = vld [vmem:[#allocation5 + $0x650] sm:$0xff]
    %v263 = vld [vmem:[#allocation5 + $0x658] sm:$0xff]
    %v264 = vld [vmem:[#allocation5 + $0x660] sm:$0xff]
    %v265 = vld [vmem:[#allocation5 + $0x668] sm:$0xff]
    %v266 = vld [vmem:[#allocation5 + $0x670] sm:$0xff]
    %v267 = vld [vmem:[#allocation5 + $0x678] sm:$0xff]
    %v268 = vld [vmem:[#allocation5 + $0x680] sm:$0xff]
    %v269 = vld [vmem:[#allocation5 + $0x688] sm:$0xff]
    %v270 = vld [vmem:[#allocation5 + $0x690] sm:$0xff]
    %v271 = vld [vmem:[#allocation5 + $0x698] sm:$0xff]
    %v272 = vld [vmem:[#allocation5 + $0x6a0] sm:$0xff]
    %v273 = vld [vmem:[#allocation5 + $0x6a8] sm:$0xff]
    %v274 = vld [vmem:[#allocation5 + $0x6b0] sm:$0xff]
    %v275 = vld [vmem:[#allocation5 + $0x6b8] sm:$0xff]
    %v276 = vld [vmem:[#allocation5 + $0x6c0] sm:$0xff]
    %v277 = vld [vmem:[#allocation5 + $0x6c8] sm:$0xff]
    %v278 = vld [vmem:[#allocation5 + $0x6d0] sm:$0xff]
    %v279 = vld [vmem:[#allocation5 + $0x6d8] sm:$0xff]
    %v280 = vld [vmem:[#allocation5 + $0x6e0] sm:$0xff]
    %v281 = vld [vmem:[#allocation5 + $0x6e8] sm:$0xff]
    %v282 = vld [vmem:[#allocation5 + $0x6f0] sm:$0xff]
    %v283 = vld [vmem:[#allocation5 + $0x6f8] sm:$0xff]
    %v284 = vld [vmem:[#allocation5 + $0x700] sm:$0xff]
    %v285 = vld [vmem:[#allocation5 + $0x708] sm:$0xff]
    %v286 = vld [vmem:[#allocation5 + $0x710] sm:$0xff]
    %v287 = vld [vmem:[#allocation5 + $0x718] sm:$0xff]
    %v288 = vld [vmem:[#allocation5 + $0x720] sm:$0xff]
    %v289 = vld [vmem:[#allocation5 + $0x728] sm:$0xff]
    %v290 = vld [vmem:[#allocation5 + $0x730] sm:$0xff]
    %v291 = vld [vmem:[#allocation5 + $0x738] sm:$0xff]
    %v292 = vld [vmem:[#allocation5 + $0x740] sm:$0xff]
    %v293 = vld [vmem:[#allocation5 + $0x748] sm:$0xff]
    %v294 = vld [vmem:[#allocation5 + $0x750] sm:$0xff]
    %v295 = vld [vmem:[#allocation5 + $0x758] sm:$0xff]
    %v296 = vld [vmem:[#allocation5 + $0x760] sm:$0xff]
    %v297 = vld [vmem:[#allocation5 + $0x768] sm:$0xff]
    %v298 = vld [vmem:[#allocation5 + $0x770] sm:$0xff]
    %v299 = vld [vmem:[#allocation5 + $0x778] sm:$0xff]
    %v300 = vld [vmem:[#allocation5 + $0x780] sm:$0xff]
    %v301 = vld [vmem:[#allocation5 + $0x788] sm:$0xff]
    %v302 = vld [vmem:[#allocation5 + $0x790] sm:$0xff]
    %v303 = vld [vmem:[#allocation5 + $0x798] sm:$0xff]
    %v304 = vld [vmem:[#allocation5 + $0x7a0] sm:$0xff]
    %v305 = vld [vmem:[#allocation5 + $0x7a8] sm:$0xff]
    %v306 = vld [vmem:[#allocation5 + $0x7b0] sm:$0xff]
    %v307 = vld [vmem:[#allocation5 + $0x7b8] sm:$0xff]
    %v308 = vld [vmem:[#allocation5 + $0x7c0] sm:$0xff]
    %v309 = vld [vmem:[#allocation5 + $0x7c8] sm:$0xff]
    %v310 = vld [vmem:[#allocation5 + $0x7d0] sm:$0xff]
    %v311 = vld [vmem:[#allocation5 + $0x7d8] sm:$0xff]
    %v312 = vld [vmem:[#allocation5 + $0x7e0] sm:$0xff]
    %v313 = vld [vmem:[#allocation5 + $0x7e8] sm:$0xff]
    %v314 = vld [vmem:[#allocation5 + $0x7f0] sm:$0xff]
    %v315 = vld [vmem:[#allocation5 + $0x7f8] sm:$0xff]
    %v316 = vld [vmem:[#allocation7] sm:$0x3]
    %v318 = vperm.slane %v316, 0
    %v319 = vperm.slane %v316, 1
    %324 = vst [vmem:[#allocation1] ss:$4 sm:$0xff] %v58
    %s325 = scalar_lea.vmem [#allocation1], 32
    %326 = vst [vmem:[%s325] ss:$4 sm:$0xff] %v59
    %v327 = vld.sshfl [vmem:[#allocation1] sm:$0xff pattern:$0x73625140]
    %v328 = vld.sshfl [vmem:[#allocation1 + $0x8] sm:$0xff pattern:$0x73625140]
    %v329 = vld.sshfl [vmem:[#allocation1 + $0x10] sm:$0xff pattern:$0x73625140]
    %v330 = vld.sshfl [vmem:[#allocation1 + $0x18] sm:$0xff pattern:$0x73625140]
    %v331 = vld.sshfl [vmem:[#allocation1 + $0x20] sm:$0xff pattern:$0x73625140]
    %v332 = vld.sshfl [vmem:[#allocation1 + $0x28] sm:$0xff pattern:$0x73625140]
    %v333 = vld.sshfl [vmem:[#allocation1 + $0x30] sm:$0xff pattern:$0x73625140]
    %v334 = vld.sshfl [vmem:[#allocation1 + $0x38] sm:$0xff pattern:$0x73625140]
    %343 = vmatpush.msra.mxu0 %v90
    %344 = vmatpush.msra.mxu0 %v88
    %345 = vmatpush.msra.mxu0 %v86
    %346 = vmatpush.msra.mxu0 %v84
    %347 = vmatpush.msra.mxu0 %v82
    %348 = vmatpush.msra.mxu0 %v80
    %349 = vmatpush.msra.mxu0 %v78
    %350 = vmatpush.msra.mxu0 %v76
    %351 = vmatpush.msra.mxu0 %v74
    %352 = vmatpush.msra.mxu0 %v72
    %353 = vmatpush.msra.mxu0 %v70
    %354 = vmatpush.msra.mxu0 %v68
    %355 = vmatpush.msra.mxu0 %v66
    %356 = vmatpush.msra.mxu0 %v64
    %357 = vmatpush.msra.mxu0 %v62
    %358 = vmatpush.msra.mxu0 %v60
    %359 = vmatmul.f32.gmra.mxu0 %v327
    %v360 = vpop.f32.mrf.mxu0
    %v361 = vadd.f32 %v318, %v360
    %362 = vdwg.mxu0
    %363 = vmatpush.msra.mxu0 %v122
    %364 = vmatpush.msra.mxu0 %v120
    %365 = vmatpush.msra.mxu0 %v118
    %366 = vmatpush.msra.mxu0 %v116
    %367 = vmatpush.msra.mxu0 %v114
    %368 = vmatpush.msra.mxu0 %v112
    %369 = vmatpush.msra.mxu0 %v110
    %370 = vmatpush.msra.mxu0 %v108
    %371 = vmatpush.msra.mxu0 %v106
    %372 = vmatpush.msra.mxu0 %v104
    %373 = vmatpush.msra.mxu0 %v102
    %374 = vmatpush.msra.mxu0 %v100
    %375 = vmatpush.msra.mxu0 %v98
    %376 = vmatpush.msra.mxu0 %v96
    %377 = vmatpush.msra.mxu0 %v94
    %378 = vmatpush.msra.mxu0 %v92
    %379 = vmatmul.f32.gmra.mxu0 %v328
    %v380 = vpop.f32.mrf.mxu0
    %v381 = vadd.f32 %v361, %v380
    %382 = vdwg.mxu0
    %383 = vmatpush.msra.mxu0 %v154
    %384 = vmatpush.msra.mxu0 %v152
    %385 = vmatpush.msra.mxu0 %v150
    %386 = vmatpush.msra.mxu0 %v148
    %387 = vmatpush.msra.mxu0 %v146
    %388 = vmatpush.msra.mxu0 %v144
    %389 = vmatpush.msra.mxu0 %v142
    %390 = vmatpush.msra.mxu0 %v140
    %391 = vmatpush.msra.mxu0 %v138
    %392 = vmatpush.msra.mxu0 %v136
    %393 = vmatpush.msra.mxu0 %v134
    %394 = vmatpush.msra.mxu0 %v132
    %395 = vmatpush.msra.mxu0 %v130
    %396 = vmatpush.msra.mxu0 %v128
    %397 = vmatpush.msra.mxu0 %v126
    %398 = vmatpush.msra.mxu0 %v124
    %399 = vmatmul.f32.gmra.mxu0 %v329
    %v400 = vpop.f32.mrf.mxu0
    %v401 = vadd.f32 %v381, %v400
    %402 = vdwg.mxu0
    %403 = vmatpush.msra.mxu0 %v186
    %404 = vmatpush.msra.mxu0 %v184
    %405 = vmatpush.msra.mxu0 %v182
    %406 = vmatpush.msra.mxu0 %v180
    %407 = vmatpush.msra.mxu0 %v178
    %408 = vmatpush.msra.mxu0 %v176
    %409 = vmatpush.msra.mxu0 %v174
    %410 = vmatpush.msra.mxu0 %v172
    %411 = vmatpush.msra.mxu0 %v170
    %412 = vmatpush.msra.mxu0 %v168
    %413 = vmatpush.msra.mxu0 %v166
    %414 = vmatpush.msra.mxu0 %v164
    %415 = vmatpush.msra.mxu0 %v162
    %416 = vmatpush.msra.mxu0 %v160
    %417 = vmatpush.msra.mxu0 %v158
    %418 = vmatpush.msra.mxu0 %v156
    %419 = vmatmul.f32.gmra.mxu0 %v330
    %v420 = vpop.f32.mrf.mxu0
    %v421 = vadd.f32 %v401, %v420
    %422 = vdwg.mxu0
    %423 = vmatpush.msra.mxu0 %v218
    %424 = vmatpush.msra.mxu0 %v216
    %425 = vmatpush.msra.mxu0 %v214
    %426 = vmatpush.msra.mxu0 %v212
    %427 = vmatpush.msra.mxu0 %v210
    %428 = vmatpush.msra.mxu0 %v208
    %429 = vmatpush.msra.mxu0 %v206
    %430 = vmatpush.msra.mxu0 %v204
    %431 = vmatpush.msra.mxu0 %v202
    %432 = vmatpush.msra.mxu0 %v200
    %433 = vmatpush.msra.mxu0 %v198
    %434 = vmatpush.msra.mxu0 %v196
    %435 = vmatpush.msra.mxu0 %v194
    %436 = vmatpush.msra.mxu0 %v192
    %437 = vmatpush.msra.mxu0 %v190
    %438 = vmatpush.msra.mxu0 %v188
    %439 = vmatmul.f32.gmra.mxu0 %v331
    %v440 = vpop.f32.mrf.mxu0
    %v441 = vadd.f32 %v421, %v440
    %442 = vdwg.mxu0
    %443 = vmatpush.msra.mxu0 %v250
    %444 = vmatpush.msra.mxu0 %v248
    %445 = vmatpush.msra.mxu0 %v246
    %446 = vmatpush.msra.mxu0 %v244
    %447 = vmatpush.msra.mxu0 %v242
    %448 = vmatpush.msra.mxu0 %v240
    %449 = vmatpush.msra.mxu0 %v238
    %450 = vmatpush.msra.mxu0 %v236
    %451 = vmatpush.msra.mxu0 %v234
    %452 = vmatpush.msra.mxu0 %v232
    %453 = vmatpush.msra.mxu0 %v230
    %454 = vmatpush.msra.mxu0 %v228
    %455 = vmatpush.msra.mxu0 %v226
    %456 = vmatpush.msra.mxu0 %v224
    %457 = vmatpush.msra.mxu0 %v222
    %458 = vmatpush.msra.mxu0 %v220
    %459 = vmatmul.f32.gmra.mxu0 %v332
    %v460 = vpop.f32.mrf.mxu0
    %v461 = vadd.f32 %v441, %v460
    %462 = vdwg.mxu0
    %463 = vmatpush.msra.mxu0 %v282
    %464 = vmatpush.msra.mxu0 %v280
    %465 = vmatpush.msra.mxu0 %v278
    %466 = vmatpush.msra.mxu0 %v276
    %467 = vmatpush.msra.mxu0 %v274
    %468 = vmatpush.msra.mxu0 %v272
    %469 = vmatpush.msra.mxu0 %v270
    %470 = vmatpush.msra.mxu0 %v268
    %471 = vmatpush.msra.mxu0 %v266
    %472 = vmatpush.msra.mxu0 %v264
    %473 = vmatpush.msra.mxu0 %v262
    %474 = vmatpush.msra.mxu0 %v260
    %475 = vmatpush.msra.mxu0 %v258
    %476 = vmatpush.msra.mxu0 %v256
    %477 = vmatpush.msra.mxu0 %v254
    %478 = vmatpush.msra.mxu0 %v252
    %479 = vmatmul.f32.gmra.mxu0 %v333
    %v480 = vpop.f32.mrf.mxu0
    %v481 = vadd.f32 %v461, %v480
    %482 = vdwg.mxu0
    %483 = vmatpush.msra.mxu0 %v314
    %484 = vmatpush.msra.mxu0 %v312
    %485 = vmatpush.msra.mxu0 %v310
    %486 = vmatpush.msra.mxu0 %v308
    %487 = vmatpush.msra.mxu0 %v306
    %488 = vmatpush.msra.mxu0 %v304
    %489 = vmatpush.msra.mxu0 %v302
    %490 = vmatpush.msra.mxu0 %v300
    %491 = vmatpush.msra.mxu0 %v298
    %492 = vmatpush.msra.mxu0 %v296
    %493 = vmatpush.msra.mxu0 %v294
    %494 = vmatpush.msra.mxu0 %v292
    %495 = vmatpush.msra.mxu0 %v290
    %496 = vmatpush.msra.mxu0 %v288
    %497 = vmatpush.msra.mxu0 %v286
    %498 = vmatpush.msra.mxu0 %v284
    %499 = vmatmul.f32.gmra.mxu0 %v334
    %v500 = vpop.f32.mrf.mxu0
    %v501 = vadd.f32 %v481, %v500
    %502 = vdwg.mxu0
    %503 = vmatpush.msra.mxu0 %v91
    %504 = vmatpush.msra.mxu0 %v89
    %505 = vmatpush.msra.mxu0 %v87
    %506 = vmatpush.msra.mxu0 %v85
    %507 = vmatpush.msra.mxu0 %v83
    %508 = vmatpush.msra.mxu0 %v81
    %509 = vmatpush.msra.mxu0 %v79
    %510 = vmatpush.msra.mxu0 %v77
    %511 = vmatpush.msra.mxu0 %v75
    %512 = vmatpush.msra.mxu0 %v73
    %513 = vmatpush.msra.mxu0 %v71
    %514 = vmatpush.msra.mxu0 %v69
    %515 = vmatpush.msra.mxu0 %v67
    %516 = vmatpush.msra.mxu0 %v65
    %517 = vmatpush.msra.mxu0 %v63
    %518 = vmatpush.msra.mxu0 %v61
    %519 = vmatmul.f32.gmra.mxu0 %v327
    %v520 = vpop.f32.mrf.mxu0
    %v521 = vadd.f32 %v319, %v520
    %522 = vdwg.mxu0
    %523 = vmatpush.msra.mxu0 %v123
    %524 = vmatpush.msra.mxu0 %v121
    %525 = vmatpush.msra.mxu0 %v119
    %526 = vmatpush.msra.mxu0 %v117
    %527 = vmatpush.msra.mxu0 %v115
    %528 = vmatpush.msra.mxu0 %v113
    %529 = vmatpush.msra.mxu0 %v111
    %530 = vmatpush.msra.mxu0 %v109
    %531 = vmatpush.msra.mxu0 %v107
    %532 = vmatpush.msra.mxu0 %v105
    %533 = vmatpush.msra.mxu0 %v103
    %534 = vmatpush.msra.mxu0 %v101
    %535 = vmatpush.msra.mxu0 %v99
    %536 = vmatpush.msra.mxu0 %v97
    %537 = vmatpush.msra.mxu0 %v95
    %538 = vmatpush.msra.mxu0 %v93
    %539 = vmatmul.f32.gmra.mxu0 %v328
    %v540 = vpop.f32.mrf.mxu0
    %v541 = vadd.f32 %v521, %v540
    %542 = vdwg.mxu0
    %543 = vmatpush.msra.mxu0 %v155
    %544 = vmatpush.msra.mxu0 %v153
    %545 = vmatpush.msra.mxu0 %v151
    %546 = vmatpush.msra.mxu0 %v149
    %547 = vmatpush.msra.mxu0 %v147
    %548 = vmatpush.msra.mxu0 %v145
    %549 = vmatpush.msra.mxu0 %v143
    %550 = vmatpush.msra.mxu0 %v141
    %551 = vmatpush.msra.mxu0 %v139
    %552 = vmatpush.msra.mxu0 %v137
    %553 = vmatpush.msra.mxu0 %v135
    %554 = vmatpush.msra.mxu0 %v133
    %555 = vmatpush.msra.mxu0 %v131
    %556 = vmatpush.msra.mxu0 %v129
    %557 = vmatpush.msra.mxu0 %v127
    %558 = vmatpush.msra.mxu0 %v125
    %559 = vmatmul.f32.gmra.mxu0 %v329
    %v560 = vpop.f32.mrf.mxu0
    %v561 = vadd.f32 %v541, %v560
    %562 = vdwg.mxu0
    %563 = vmatpush.msra.mxu0 %v187
    %564 = vmatpush.msra.mxu0 %v185
    %565 = vmatpush.msra.mxu0 %v183
    %566 = vmatpush.msra.mxu0 %v181
    %567 = vmatpush.msra.mxu0 %v179
    %568 = vmatpush.msra.mxu0 %v177
    %569 = vmatpush.msra.mxu0 %v175
    %570 = vmatpush.msra.mxu0 %v173
    %571 = vmatpush.msra.mxu0 %v171
    %572 = vmatpush.msra.mxu0 %v169
    %573 = vmatpush.msra.mxu0 %v167
    %574 = vmatpush.msra.mxu0 %v165
    %575 = vmatpush.msra.mxu0 %v163
    %576 = vmatpush.msra.mxu0 %v161
    %577 = vmatpush.msra.mxu0 %v159
    %578 = vmatpush.msra.mxu0 %v157
    %579 = vmatmul.f32.gmra.mxu0 %v330
    %v580 = vpop.f32.mrf.mxu0
    %v581 = vadd.f32 %v561, %v580
    %582 = vdwg.mxu0
    %583 = vmatpush.msra.mxu0 %v219
    %584 = vmatpush.msra.mxu0 %v217
    %585 = vmatpush.msra.mxu0 %v215
    %586 = vmatpush.msra.mxu0 %v213
    %587 = vmatpush.msra.mxu0 %v211
    %588 = vmatpush.msra.mxu0 %v209
    %589 = vmatpush.msra.mxu0 %v207
    %590 = vmatpush.msra.mxu0 %v205
    %591 = vmatpush.msra.mxu0 %v203
    %592 = vmatpush.msra.mxu0 %v201
    %593 = vmatpush.msra.mxu0 %v199
    %594 = vmatpush.msra.mxu0 %v197
    %595 = vmatpush.msra.mxu0 %v195
    %596 = vmatpush.msra.mxu0 %v193
    %597 = vmatpush.msra.mxu0 %v191
    %598 = vmatpush.msra.mxu0 %v189
    %599 = vmatmul.f32.gmra.mxu0 %v331
    %v600 = vpop.f32.mrf.mxu0
    %v601 = vadd.f32 %v581, %v600
    %602 = vdwg.mxu0
    %603 = vmatpush.msra.mxu0 %v251
    %604 = vmatpush.msra.mxu0 %v249
    %605 = vmatpush.msra.mxu0 %v247
    %606 = vmatpush.msra.mxu0 %v245
    %607 = vmatpush.msra.mxu0 %v243
    %608 = vmatpush.msra.mxu0 %v241
    %609 = vmatpush.msra.mxu0 %v239
    %610 = vmatpush.msra.mxu0 %v237
    %611 = vmatpush.msra.mxu0 %v235
    %612 = vmatpush.msra.mxu0 %v233
    %613 = vmatpush.msra.mxu0 %v231
    %614 = vmatpush.msra.mxu0 %v229
    %615 = vmatpush.msra.mxu0 %v227
    %616 = vmatpush.msra.mxu0 %v225
    %617 = vmatpush.msra.mxu0 %v223
    %618 = vmatpush.msra.mxu0 %v221
    %619 = vmatmul.f32.gmra.mxu0 %v332
    %v620 = vpop.f32.mrf.mxu0
    %v621 = vadd.f32 %v601, %v620
    %622 = vdwg.mxu0
    %623 = vmatpush.msra.mxu0 %v283
    %624 = vmatpush.msra.mxu0 %v281
    %625 = vmatpush.msra.mxu0 %v279
    %626 = vmatpush.msra.mxu0 %v277
    %627 = vmatpush.msra.mxu0 %v275
    %628 = vmatpush.msra.mxu0 %v273
    %629 = vmatpush.msra.mxu0 %v271
    %630 = vmatpush.msra.mxu0 %v269
    %631 = vmatpush.msra.mxu0 %v267
    %632 = vmatpush.msra.mxu0 %v265
    %633 = vmatpush.msra.mxu0 %v263
    %634 = vmatpush.msra.mxu0 %v261
    %635 = vmatpush.msra.mxu0 %v259
    %636 = vmatpush.msra.mxu0 %v257
    %637 = vmatpush.msra.mxu0 %v255
    %638 = vmatpush.msra.mxu0 %v253
    %639 = vmatmul.f32.gmra.mxu0 %v333
    %v640 = vpop.f32.mrf.mxu0
    %v641 = vadd.f32 %v621, %v640
    %642 = vdwg.mxu0
    %643 = vmatpush.msra.mxu0 %v315
    %644 = vmatpush.msra.mxu0 %v313
    %645 = vmatpush.msra.mxu0 %v311
    %646 = vmatpush.msra.mxu0 %v309
    %647 = vmatpush.msra.mxu0 %v307
    %648 = vmatpush.msra.mxu0 %v305
    %649 = vmatpush.msra.mxu0 %v303
    %650 = vmatpush.msra.mxu0 %v301
    %651 = vmatpush.msra.mxu0 %v299
    %652 = vmatpush.msra.mxu0 %v297
    %653 = vmatpush.msra.mxu0 %v295
    %654 = vmatpush.msra.mxu0 %v293
    %655 = vmatpush.msra.mxu0 %v291
    %656 = vmatpush.msra.mxu0 %v289
    %657 = vmatpush.msra.mxu0 %v287
    %658 = vmatpush.msra.mxu0 %v285
    %659 = vmatmul.f32.gmra.mxu0 %v334
    %v660 = vpop.f32.mrf.mxu0
    %v661 = vadd.f32 %v641, %v660
    %662 = vdwg.mxu0
    %v665 = vrot.slane %v661, 6
    %vm666 = vcmask 1041408
    %v667 = vsel %vm666, %v501, %v665
    %669 = vst [vmem:[#allocation8] sm:$0xf] %v667
    // Predicated region
    $region26: #{tpu_custom_call.1} parent=1 // pred_check
      _
    $region27: #{tpu_custom_call.1} parent=1 // pred_check_branch
      %671 = sbr.rel (0) target = $region29
    $region28: #{tpu_custom_call.1} parent=1 // pred_region
      %673 = vsyncadd [#allocation4], 0
      %s675 = sshll.u32 [#allocation8], 4
      %s676 = int_to_ptr.vmem [resolvable:$true] %s675
      %s677 = sshll.u32 %s3, 4
      %s678 = int_to_ptr.hbm [resolvable:$true] %s677
      %680 = dma.vmem_to_hbm [thread:$0]  %s676, 64, %s678, [#allocation4]
    $region29: #{tpu_custom_call.1} parent=1 // pred_fallthru
      _
    // Predicated region
    $region30: #{tpu_custom_call.1} parent=1 // pred_check
      _
    $region31: #{tpu_custom_call.1} parent=1 // pred_check_branch
      %682 = sbr.rel (0) target = $region33
    $region32: #{tpu_custom_call.1} parent=1 // pred_region
      %684 = dma.done [#allocation4], 64
    $region33: #{tpu_custom_call.1} parent=1 // pred_fallthru
      _
    %685 = vsyncpa [#allocation3], 1
    %686 = vsyncpa [#allocation6], 1
    %687 = vsyncpa [#allocation4], 1

</llo_original>
